<compile_context>
chip_gen: v5e
topology: v5e:2x2
jax: 0.10.0
libtpu: 0.0.40
codegen_flags: <defaults>
</compile_context>

<pallas_src>
import functools
import math

import jax
import jax.numpy as jnp
from jax.experimental import pallas as pl
from jax.experimental.pallas import tpu as pltpu


def _vmem_limit_bytes():
    """Generation-aware VMEM budget: ~75% of physical capacity, capped at 100 MiB."""
    try:
        cap = pltpu.get_tpu_info().vmem_capacity_bytes
    except Exception:  # pragma: no cover - fallback if query is unavailable
        cap = 64 * 1024 * 1024
    return max(32 * 1024 * 1024, min(int(cap) * 3 // 4, 100 * 1024 * 1024))


# --------------------------------------------------------------------------- #
# Kernel 1: K / V projections, computed once per (batch, head-block).
# --------------------------------------------------------------------------- #
def _kv_proj_kernel(k_ref, v_ref, wk_ref, bk_ref, wv_ref, bv_ref,
                    kout_ref, vout_ref, *, resident_weights):
    """k_ref/v_ref: (T2, F) bf16; wk/wv: (Hb|1, F, hbd) bf16; bk/bv: (Hb|1, 1, hbd) f32.

    kout/vout: (T2, hbd) bf16 for the current (batch, head-block).
    """
    f32 = jnp.float32
    w = pl.program_id(1) if resident_weights else 0
    kout_ref[...] = (jnp.dot(k_ref[...], wk_ref[w], preferred_element_type=f32)
                     + bk_ref[w]).astype(kout_ref.dtype)
    vout_ref[...] = (jnp.dot(v_ref[...], wv_ref[w], preferred_element_type=f32)
                     + bv_ref[w]).astype(vout_ref.dtype)


def _kv_projection(key_bf, value_bf, wk_h, bk_h, wv_h, bv_h, *,
                   Hb, hbd, resident, vmem_limit):
    B, T2, F = key_bf.shape
    kern = functools.partial(_kv_proj_kernel, resident_weights=resident)

    kv_spec = pl.BlockSpec((None, T2, F), lambda b, h: (b, 0, 0))
    if resident:
        w_spec = pl.BlockSpec((Hb, F, hbd), lambda b, h: (0, 0, 0))
        b_spec = pl.BlockSpec((Hb, 1, hbd), lambda b, h: (0, 0, 0))
    else:
        # TODO(synk): for very large F, add pl.Buffered(3) to hide per-block DMA.
        w_spec = pl.BlockSpec((1, F, hbd), lambda b, h: (h, 0, 0))
        b_spec = pl.BlockSpec((1, 1, hbd), lambda b, h: (h, 0, 0))
    out_spec = pl.BlockSpec((None, None, T2, hbd), lambda b, h: (b, h, 0, 0))
    out_shape = jax.ShapeDtypeStruct((B, Hb, T2, hbd), jnp.bfloat16)

    return pl.pallas_call(
        kern,
        out_shape=(out_shape, out_shape),
        grid_spec=pltpu.PrefetchScalarGridSpec(
            num_scalar_prefetch=0,
            grid=(B, Hb),
            in_specs=[kv_spec, kv_spec, w_spec, b_spec, w_spec, b_spec],
            out_specs=[out_spec, out_spec],
        ),
        compiler_params=pltpu.CompilerParams(
            dimension_semantics=("parallel", "parallel"),
            vmem_limit_bytes=vmem_limit,
        ),
    )(key_bf, value_bf, wk_h, bk_h, wv_h, bv_h)


# --------------------------------------------------------------------------- #
# Kernel 2: attention core with fused Q projection and output projection.
# --------------------------------------------------------------------------- #
def _attn_kernel(q_ref, kproj_ref, vproj_ref, bias_ref, keep_ref,
                 wq_ref, bq_ref, wo_ref, bo_ref,
                 out_ref, acc_ref, ctx_ref, *, hb, d_k, resident_weights):
    """One (batch, q-tile, head-block) step.

    q_ref: (tq, F) bf16                kproj/vproj_ref: (Hb, T2, hbd) bf16
    bias/keep_ref: (1|tq, T2) f32      wq_ref: (Hb|1, F, hbd) bf16 (scale folded)
    bq_ref: (Hb|1, 1, hbd) f32         wo_ref: (Hb|1, hbd, F) bf16
    bo_ref: (1, F) f32                 out_ref: (tq, F)
    acc_ref: VMEM (tq, F) f32          ctx_ref: VMEM (tq, hbd) f32
    """
    f32, bf16 = jnp.float32, jnp.bfloat16
    hblk = pl.program_id(2)

    @pl.when(hblk == 0)
    def _init():
        acc_ref[...] = jnp.zeros_like(acc_ref)

    w = hblk if resident_weights else 0

    # Q projection for the whole head block (1/sqrt(d_k) already in W_q, b_q).
    qh = jnp.dot(q_ref[...], wq_ref[w], preferred_element_type=f32) + bq_ref[w]

    # Pre-projected K / V for this (batch, head-block): no recomputation per
    # q-tile, no per-step weight traffic.
    kh = kproj_ref[hblk]          # (T2, hbd) bf16
    vh = vproj_ref[hblk]          # (T2, hbd) bf16

    bias = bias_ref[...]          # (1 or tq, T2) f32, 0 / -1e30
    keep = keep_ref[...]          # (1 or tq, T2) f32, 1 / 0

    for j in range(hb):           # static unroll over heads in the block
        lo = j * d_k
        qj = qh[:, lo:lo + d_k].astype(bf16)        # (tq, d_k)
        kj = kh[:, lo:lo + d_k]                     # (T2, d_k)
        vj = vh[:, lo:lo + d_k]                     # (T2, d_k)

        s = jax.lax.dot_general(qj, kj, (((1,), (1,)), ((), ())),
                                preferred_element_type=f32) + bias   # (tq, T2)
        s = s - jnp.max(s, axis=-1, keepdims=True)
        p = jnp.exp(s)
        attn = p * pl.reciprocal(jnp.sum(p, axis=-1, keepdims=True), approx=True)
        # masked_fill(mask, 0.0) after softmax; fully-masked rows rely on `keep`.
        attn = attn * keep
        # TODO(synk): dropout on attn omitted (eval mode / dropout_rate = 0).

        ctx_ref[:, lo:lo + d_k] = jnp.dot(attn.astype(bf16), vj,
                                          preferred_element_type=f32)

    # Output projection fused into the head-block reduction.
    acc_ref[...] += jnp.dot(ctx_ref[...].astype(bf16), wo_ref[w],
                            preferred_element_type=f32)

    @pl.when(hblk == pl.num_programs(2) - 1)
    def _finalize():
        out_ref[...] = (acc_ref[...] + bo_ref[...]).astype(out_ref.dtype)


# --------------------------------------------------------------------------- #
# Wrapper
# --------------------------------------------------------------------------- #
def multi_headed_attention(query, key, value, mask, params, *, n_head,
                           q_block=None, head_block=None, resident_weights=None):
    """query: (B,T1,F)  key/value: (B,T2,F)  mask: (B,1,T2)|(B,T1,T2)|None -> (B,T1,F)."""
    B, T1, F = query.shape
    T2 = key.shape[1]
    assert F % n_head == 0
    d_k = F // n_head
    wq, bq, wk, bk, wv, bv, wo, bo = params

    f32, bf16 = jnp.float32, jnp.bfloat16
    scale = 1.0 / math.sqrt(d_k)

    # ---- head blocking: hb*d_k ~ 128-256 lane width ------------------------
    if head_block is None:
        target = max(1, 256 // d_k)
        head_block = 1
        for cand in range(min(n_head, target), 0, -1):
            if n_head % cand == 0:
                head_block = cand
                break
    hb = head_block
    assert n_head % hb == 0
    Hb = n_head // hb
    hbd = hb * d_k

    # ---- query-time tiling --------------------------------------------------
    if q_block is None:
        q_block = T1
        for t in (256, 128, 64, 32, 16, 8):
            if T1 % t == 0:
                q_block = t
                break
    tq = min(q_block, T1)
    assert T1 % tq == 0
    nq = T1 // tq

    vmem_limit = _vmem_limit_bytes()

    # ---- weights: per head-block layout, scale folded into W_q/b_q ----------
    wq_h = (wq * scale).reshape(F, Hb, hbd).transpose(1, 0, 2).astype(bf16)
    bq_h = (bq * scale).reshape(Hb, 1, hbd).astype(f32)
    wk_h = wk.reshape(F, Hb, hbd).transpose(1, 0, 2).astype(bf16)
    bk_h = bk.reshape(Hb, 1, hbd).astype(f32)
    wv_h = wv.reshape(F, Hb, hbd).transpose(1, 0, 2).astype(bf16)
    bv_h = bv.reshape(Hb, 1, hbd).astype(f32)
    wo_h = wo.reshape(Hb, hbd, F).astype(bf16)
    bo_2 = bo.reshape(1, F).astype(f32)

    if resident_weights is None:
        # Two resident F x F bf16 matrices per kernel (~4*F*F bytes); keep them
        # at or below ~1/4 of the VMEM budget, otherwise stream per head-block.
        resident_weights = (4 * F * F) <= (vmem_limit // 4)

    # ---- bf16 activations (half the DMA / VMEM, MXU operands are bf16) ------
    q_bf = query.astype(bf16)
    k_bf = key.astype(bf16)
    v_bf = value.astype(bf16)

    # ---- K/V projections once per (batch, head-block) -----------------------
    kproj, vproj = _kv_projection(k_bf, v_bf, wk_h, bk_h, wv_h, bv_h,
                                  Hb=Hb, hbd=hbd, resident=resident_weights,
                                  vmem_limit=vmem_limit)

    # ---- mask -> additive bias + post-softmax keep (computed once) ----------
    if mask is None:
        bias = jnp.zeros((B, 1, T2), f32)
        keep = jnp.ones((B, 1, T2), f32)
    else:
        assert mask.shape[0] == B and mask.shape[-1] == T2 and mask.shape[1] in (1, T1), mask.shape
        masked = (mask == 0)
        bias = jnp.where(masked, -1e30, 0.0).astype(f32)
        keep = jnp.where(masked, 0.0, 1.0).astype(f32)
    Tm = bias.shape[1]

    kernel = functools.partial(_attn_kernel, hb=hb, d_k=d_k,
                               resident_weights=resident_weights)

    q_spec = pl.BlockSpec((None, tq, F), lambda b, i, h: (b, i, 0))
    # Projected K/V for the whole batch element stay VMEM-resident across the
    # q-tile and head-block axes (block index constant in i and h -> one DMA).
    kvproj_spec = pl.BlockSpec((None, Hb, T2, hbd), lambda b, i, h: (b, 0, 0, 0))
    if Tm == 1:
        m_spec = pl.BlockSpec((None, 1, T2), lambda b, i, h: (b, 0, 0))
    else:
        m_spec = pl.BlockSpec((None, tq, T2), lambda b, i, h: (b, i, 0))
    if resident_weights:
        wq_spec = pl.BlockSpec((Hb, F, hbd), lambda b, i, h: (0, 0, 0))
        bq_spec = pl.BlockSpec((Hb, 1, hbd), lambda b, i, h: (0, 0, 0))
        wo_spec = pl.BlockSpec((Hb, hbd, F), lambda b, i, h: (0, 0, 0))
    else:
        # TODO(synk): for very large F add pl.Buffered(3) here to hide the
        # per-step weight DMA (v7x fallback suggested by the review).
        wq_spec = pl.BlockSpec((1, F, hbd), lambda b, i, h: (h, 0, 0))
        bq_spec = pl.BlockSpec((1, 1, hbd), lambda b, i, h: (h, 0, 0))
        wo_spec = pl.BlockSpec((1, hbd, F), lambda b, i, h: (h, 0, 0))
    bo_spec = pl.BlockSpec((1, F), lambda b, i, h: (0, 0))

    # TODO(synk): for very long T2, tile the key/value time axis (flash-style
    # online softmax) instead of holding the full (T2, hbd) K/V per step.
    return pl.pallas_call(
        kernel,
        out_shape=jax.ShapeDtypeStruct((B, T1, F), query.dtype),
        grid_spec=pltpu.PrefetchScalarGridSpec(
            num_scalar_prefetch=0,
            grid=(B, nq, Hb),
            in_specs=[
                q_spec,                    # query (bf16)
                kvproj_spec, kvproj_spec,  # projected K, V (bf16)
                m_spec, m_spec,            # bias, keep
                wq_spec, bq_spec,          # W_q (scaled), b_q (scaled)
                wo_spec, bo_spec,          # W_o, b_o
            ],
            out_specs=q_spec,
            scratch_shapes=[pltpu.VMEM((tq, F), jnp.float32),
                            pltpu.VMEM((tq, hbd), jnp.float32)],
        ),
        compiler_params=pltpu.CompilerParams(
            dimension_semantics=("parallel", "parallel", "arbitrary"),
            vmem_limit_bytes=vmem_limit,
        ),
    )(q_bf, kproj, vproj, bias, keep, wq_h, bq_h, wo_h, bo_2)


# --------------------------------------------------------------------------- #
# Pure-JAX (f32) reference reproducing the PyTorch forward.
# --------------------------------------------------------------------------- #
def _reference_mha(query, key, value, mask, params, *, n_head):
    B, T1, F = query.shape
    d_k = F // n_head
    wq, bq, wk, bk, wv, bv, wo, bo = params

    def split_heads(x):
        return x.reshape(B, -1, n_head, d_k).transpose(0, 2, 1, 3)

    q = split_heads(query @ wq + bq)
    k = split_heads(key @ wk + bk)
    v = split_heads(value @ wv + bv)
    scores = jnp.einsum('bhtd,bhsd->bhts', q, k) / math.sqrt(d_k)
    if mask is not None:
        m = (mask[:, None, :, :] == 0)
        scores = jnp.where(m, -1e30, scores)
        attn = jax.nn.softmax(scores, axis=-1)
        attn = jnp.where(m, 0.0, attn)
    else:
        attn = jax.nn.softmax(scores, axis=-1)
    x = jnp.einsum('bhts,bhsd->bhtd', attn, v)
    x = x.transpose(0, 2, 1, 3).reshape(B, T1, F)
    return x @ wo + bo


if __name__ == "__main__":
    B, T1, T2 = 2, 8, 8
    n_head, n_feat = 4, 32

    key_root = jax.random.PRNGKey(0)
    keys = jax.random.split(key_root, 12)
    bound = 1.0 / math.sqrt(n_feat)

    def u(k, shape):
        return jax.random.uniform(k, shape, jnp.float32, -bound, bound)

    params = (
        u(keys[0], (n_feat, n_feat)), u(keys[1], (n_feat,)),   # W_q, b_q
        u(keys[2], (n_feat, n_feat)), u(keys[3], (n_feat,)),   # W_k, b_k
        u(keys[4], (n_feat, n_feat)), u(keys[5], (n_feat,)),   # W_v, b_v
        u(keys[6], (n_feat, n_feat)), u(keys[7], (n_feat,)),   # W_o, b_o
    )

    query = jax.random.normal(keys[8], (B, T1, n_feat), jnp.float32)
    key_t = jax.random.normal(keys[9], (B, T2, n_feat), jnp.float32)
    value = jax.random.normal(keys[10], (B, T2, n_feat), jnp.float32)

    # Key-padding mask (B, 1, T2): last two keys of batch 1 are padding.
    mask = jnp.ones((B, 1, T2), jnp.int32).at[1, 0, -2:].set(0)
    out = jax.block_until_ready(
        multi_headed_attention(query, key_t, value, mask, params, n_head=n_head))
    ref = _reference_mha(query, key_t, value, mask, params, n_head=n_head)
    assert out.shape == (B, T1, n_feat)
    max_err = float(jnp.max(jnp.abs(out - ref)))
    # bf16 MXU operands (f32 accumulation) + approx reciprocal => looser tol.
    assert jnp.allclose(out, ref, atol=3e-2, rtol=3e-2), max_err

    # Full attention mask (B, T1, T2) path.
    mask_full = jnp.ones((B, T1, T2), jnp.int32)
    mask_full = mask_full.at[1, :, -2:].set(0).at[0, :3, :2].set(0)
    out2 = jax.block_until_ready(
        multi_headed_attention(query, key_t, value, mask_full, params, n_head=n_head))
    ref2 = _reference_mha(query, key_t, value, mask_full, params, n_head=n_head)
    max_err2 = float(jnp.max(jnp.abs(out2 - ref2)))
    assert jnp.allclose(out2, ref2, atol=3e-2, rtol=3e-2), max_err2

    print("KERNEL_OK")
</pallas_src>

<mosaic_0001>
module attributes {stable_mosaic.version = 11 : i64} {
  func.func @_kv_proj_kernel(%arg0: i32, %arg1: i32, %arg2: memref<1x8x32xbf16, #tpu.memory_space<vmem>>, %arg3: memref<1x8x32xbf16, #tpu.memory_space<vmem>>, %arg4: memref<1x32x32xbf16, #tpu.memory_space<vmem>>, %arg5: memref<1x1x32xf32, #tpu.memory_space<vmem>>, %arg6: memref<1x32x32xbf16, #tpu.memory_space<vmem>>, %arg7: memref<1x1x32xf32, #tpu.memory_space<vmem>>, %arg8: memref<1x1x8x32xbf16, #tpu.memory_space<vmem>>, %arg9: memref<1x1x8x32xbf16, #tpu.memory_space<vmem>>) attributes {dimension_semantics = [#tpu.dimension_semantics<parallel>, #tpu.dimension_semantics<parallel>], iteration_bounds = array<i64: 2, 1>, scalar_prefetch = 0 : i64, scratch_operands = 0 : i64, tpu.core_type = #tpu.core_type<tc>, window_params = [{transform_indices = @transform_0, window_bounds = array<i64: 1, 8, 32>}, {transform_indices = @transform_1, window_bounds = array<i64: 1, 8, 32>}, {pipeline_mode = #tpu.pipeline_mode<synchronous>, transform_indices = @transform_2, window_bounds = array<i64: 1, 32, 32>}, {pipeline_mode = #tpu.pipeline_mode<synchronous>, transform_indices = @transform_3, window_bounds = array<i64: 1, 1, 32>}, {pipeline_mode = #tpu.pipeline_mode<synchronous>, transform_indices = @transform_4, window_bounds = array<i64: 1, 32, 32>}, {pipeline_mode = #tpu.pipeline_mode<synchronous>, transform_indices = @transform_5, window_bounds = array<i64: 1, 1, 32>}, {transform_indices = @transform_6, window_bounds = array<i64: 1, 1, 8, 32>}, {transform_indices = @transform_7, window_bounds = array<i64: 1, 1, 8, 32>}]} {
    %c0 = arith.constant 0 : index
    %c0_0 = arith.constant 0 : index
    %c0_1 = arith.constant 0 : index
    %0 = vector.load %arg2[%c0, %c0_0, %c0_1] : memref<1x8x32xbf16, #tpu.memory_space<vmem>>, vector<1x8x32xbf16>
    %1 = vector.shape_cast %0 : vector<1x8x32xbf16> to vector<8x32xbf16>
    %2 = arith.index_cast %arg1 : i32 to index
    %c0_2 = arith.constant 0 : index
    %c0_3 = arith.constant 0 : index
    %3 = vector.load %arg4[%2, %c0_2, %c0_3] : memref<1x32x32xbf16, #tpu.memory_space<vmem>>, vector<1x32x32xbf16>
    %4 = vector.shape_cast %3 : vector<1x32x32xbf16> to vector<32x32xbf16>
    %cst = arith.constant dense<0.000000e+00> : vector<8x32xf32>
    %5 = tpu.matmul %1, %4, %cst {dimension_numbers = #tpu.dot_dimension_numbers<[1], [0], [0], [1], [0, 0, 1, 1], [], []>} : vector<8x32xbf16>, vector<32x32xbf16>, vector<8x32xf32> -> vector<8x32xf32>
    %6 = arith.index_cast %arg1 : i32 to index
    %c0_4 = arith.constant 0 : index
    %c0_5 = arith.constant 0 : index
    %7 = vector.load %arg5[%6, %c0_4, %c0_5] : memref<1x1x32xf32, #tpu.memory_space<vmem>>, vector<1x1x32xf32>
    %8 = vector.shape_cast %7 : vector<1x1x32xf32> to vector<1x32xf32>
    %9 = vector.broadcast %8 : vector<1x32xf32> to vector<8x32xf32>
    %10 = arith.addf %5, %9 : vector<8x32xf32>
    %11 = arith.truncf %10 : vector<8x32xf32> to vector<8x32xbf16>
    %c0_6 = arith.constant 0 : index
    %c0_7 = arith.constant 0 : index
    %c0_8 = arith.constant 0 : index
    %c0_9 = arith.constant 0 : index
    %12 = vector.load %arg8[%c0_6, %c0_7, %c0_8, %c0_9] : memref<1x1x8x32xbf16, #tpu.memory_space<vmem>>, vector<1x1x8x32xbf16>
    %13 = vector.shape_cast %12 : vector<1x1x8x32xbf16> to vector<8x32xbf16>
    %14 = vector.shape_cast %11 : vector<8x32xbf16> to vector<1x1x8x32xbf16>
    tpu.vector_store %arg8[%c0_6, %c0_7, %c0_8, %c0_9], %14 {strides = array<i32>} : memref<1x1x8x32xbf16, #tpu.memory_space<vmem>>, vector<1x1x8x32xbf16>,
    %c0_10 = arith.constant 0 : index
    %c0_11 = arith.constant 0 : index
    %c0_12 = arith.constant 0 : index
    %15 = vector.load %arg3[%c0_10, %c0_11, %c0_12] : memref<1x8x32xbf16, #tpu.memory_space<vmem>>, vector<1x8x32xbf16>
    %16 = vector.shape_cast %15 : vector<1x8x32xbf16> to vector<8x32xbf16>
    %17 = arith.index_cast %arg1 : i32 to index
    %c0_13 = arith.constant 0 : index
    %c0_14 = arith.constant 0 : index
    %18 = vector.load %arg6[%17, %c0_13, %c0_14] : memref<1x32x32xbf16, #tpu.memory_space<vmem>>, vector<1x32x32xbf16>
    %19 = vector.shape_cast %18 : vector<1x32x32xbf16> to vector<32x32xbf16>
    %cst_15 = arith.constant dense<0.000000e+00> : vector<8x32xf32>
    %20 = tpu.matmul %16, %19, %cst_15 {dimension_numbers = #tpu.dot_dimension_numbers<[1], [0], [0], [1], [0, 0, 1, 1], [], []>} : vector<8x32xbf16>, vector<32x32xbf16>, vector<8x32xf32> -> vector<8x32xf32>
    %21 = arith.index_cast %arg1 : i32 to index
    %c0_16 = arith.constant 0 : index
    %c0_17 = arith.constant 0 : index
    %22 = vector.load %arg7[%21, %c0_16, %c0_17] : memref<1x1x32xf32, #tpu.memory_space<vmem>>, vector<1x1x32xf32>
    %23 = vector.shape_cast %22 : vector<1x1x32xf32> to vector<1x32xf32>
    %24 = vector.broadcast %23 : vector<1x32xf32> to vector<8x32xf32>
    %25 = arith.addf %20, %24 : vector<8x32xf32>
    %26 = arith.truncf %25 : vector<8x32xf32> to vector<8x32xbf16>
    %c0_18 = arith.constant 0 : index
    %c0_19 = arith.constant 0 : index
    %c0_20 = arith.constant 0 : index
    %c0_21 = arith.constant 0 : index
    %27 = vector.load %arg9[%c0_18, %c0_19, %c0_20, %c0_21] : memref<1x1x8x32xbf16, #tpu.memory_space<vmem>>, vector<1x1x8x32xbf16>
    %28 = vector.shape_cast %27 : vector<1x1x8x32xbf16> to vector<8x32xbf16>
    %29 = vector.shape_cast %26 : vector<8x32xbf16> to vector<1x1x8x32xbf16>
    tpu.vector_store %arg9[%c0_18, %c0_19, %c0_20, %c0_21], %29 {strides = array<i32>} : memref<1x1x8x32xbf16, #tpu.memory_space<vmem>>, vector<1x1x8x32xbf16>,
    return
  }
  func.func @transform_0(%arg0: i32, %arg1: i32) -> (i32, i32, i32) {
    %c0_i32 = arith.constant 0 : i32
    %c0_i32_0 = arith.constant 0 : i32
    %c0_i32_1 = arith.constant 0 : i32
    return %arg0, %c0_i32, %c0_i32_0 : i32, i32, i32
  }
  func.func @transform_1(%arg0: i32, %arg1: i32) -> (i32, i32, i32) {
    %c0_i32 = arith.constant 0 : i32
    %c0_i32_0 = arith.constant 0 : i32
    %c0_i32_1 = arith.constant 0 : i32
    return %arg0, %c0_i32, %c0_i32_0 : i32, i32, i32
  }
  func.func @transform_2(%arg0: i32, %arg1: i32) -> (i32, i32, i32) {
    %c0_i32 = arith.constant 0 : i32
    %c0_i32_0 = arith.constant 0 : i32
    %c0_i32_1 = arith.constant 0 : i32
    %c0_i32_2 = arith.constant 0 : i32
    return %c0_i32, %c0_i32_0, %c0_i32_1 : i32, i32, i32
  }
  func.func @transform_3(%arg0: i32, %arg1: i32) -> (i32, i32, i32) {
    %c0_i32 = arith.constant 0 : i32
    %c0_i32_0 = arith.constant 0 : i32
    %c0_i32_1 = arith.constant 0 : i32
    %c0_i32_2 = arith.constant 0 : i32
    return %c0_i32, %c0_i32_0, %c0_i32_1 : i32, i32, i32
  }
  func.func @transform_4(%arg0: i32, %arg1: i32) -> (i32, i32, i32) {
    %c0_i32 = arith.constant 0 : i32
    %c0_i32_0 = arith.constant 0 : i32
    %c0_i32_1 = arith.constant 0 : i32
    %c0_i32_2 = arith.constant 0 : i32
    return %c0_i32, %c0_i32_0, %c0_i32_1 : i32, i32, i32
  }
  func.func @transform_5(%arg0: i32, %arg1: i32) -> (i32, i32, i32) {
    %c0_i32 = arith.constant 0 : i32
    %c0_i32_0 = arith.constant 0 : i32
    %c0_i32_1 = arith.constant 0 : i32
    %c0_i32_2 = arith.constant 0 : i32
    return %c0_i32, %c0_i32_0, %c0_i32_1 : i32, i32, i32
  }
  func.func @transform_6(%arg0: i32, %arg1: i32) -> (i32, i32, i32, i32) {
    %c0_i32 = arith.constant 0 : i32
    %c0_i32_0 = arith.constant 0 : i32
    %c0_i32_1 = arith.constant 0 : i32
    return %arg0, %arg1, %c0_i32, %c0_i32_0 : i32, i32, i32, i32
  }
  func.func @transform_7(%arg0: i32, %arg1: i32) -> (i32, i32, i32, i32) {
    %c0_i32 = arith.constant 0 : i32
    %c0_i32_0 = arith.constant 0 : i32
    %c0_i32_1 = arith.constant 0 : i32
    return %arg0, %arg1, %c0_i32, %c0_i32_0 : i32, i32, i32, i32
  }
}

</mosaic_0001>

<llo_original>
// kernel: tpu_custom_call.1
$region0: #{tpu_custom_call.1}
  #allocation0 [shape = 'u32[]', space=smem, size = 0x4, offset = 0x4, fixed_abs, tag = 'smem constant byte address 0x4 - core index']
  #allocation1 [shape = 'u32[72,128]{1,0:T(1,128)}', space=vmem, size = 0x9000, scoped, tag = 'internal scratch']
  %s0 = inlined_call_operand.hbm [shape: bf16[2,8,32], index: 0, kind: input, shape index: {}]
  %s1 = inlined_call_operand.hbm [shape: bf16[2,8,32], index: 1, kind: input, shape index: {}]
  %s2 = inlined_call_operand.hbm [shape: bf16[1,32,32], index: 2, kind: input, shape index: {}]
  %s3 = inlined_call_operand.vmem [shape: f32[1,1,32], index: 3, kind: input, shape index: {}]
  %s4 = inlined_call_operand.hbm [shape: bf16[1,32,32], index: 4, kind: input, shape index: {}]
  %s5 = inlined_call_operand.vmem [shape: f32[1,1,32], index: 5, kind: input, shape index: {}]
  %s6 = inlined_call_operand.hbm [shape: bf16[2,1,8,32], index: 6, kind: output, shape index: {0}]
  %s7 = inlined_call_operand.hbm [shape: bf16[2,1,8,32], index: 7, kind: output, shape index: {1}]
  %8 = xla_tuple %s6, %s7
  %s9 = sld [smem:[#allocation0]]
  $region81: #{tpu_custom_call.1} parent=0
    _
  %s11 = ssub.s32 1, %s9
  %s12 = scalar_select 0, %s11, %s9
  $region1: #{tpu_custom_call.1} parent=0
    #allocation2 [shape = 'u8[4096]{0}', space=vmem, size = 0x1000, scoped, tag = 'input window, operand 0']
    #allocation3 [shape = 's32[2]{0}', space=sflag, size = 0x8, scoped, tag = 'scoped memory for tpu_custom_call.1']
    #allocation4 [shape = 's32[2]{0}', space=sflag, size = 0x8, scoped, tag = 'scoped memory for tpu_custom_call.1']
    #allocation5 [shape = 'u8[4096]{0}', space=vmem, size = 0x1000, scoped, tag = 'input window, operand 1']
    #allocation6 [shape = 's32[2]{0}', space=sflag, size = 0x8, scoped, tag = 'scoped memory for tpu_custom_call.1']
    #allocation7 [shape = 'u8[8192]{0}', space=vmem, size = 0x2000, scoped, tag = 'input window, operand 2, single buffered']
    #allocation8 [shape = 'u8[8192]{0}', space=vmem, size = 0x2000, scoped, tag = 'input window, operand 4, single buffered']
    #allocation9 [shape = 's32[1]{0}', space=sflag, size = 0x4, scoped, tag = 'scoped memory for tpu_custom_call.1']
    #allocation10 [shape = 'u8[4096]{0}', space=vmem, size = 0x1000, scoped, tag = 'output window, operand 0']
    #allocation11 [shape = 'u8[4096]{0}', space=vmem, size = 0x1000, scoped, tag = 'output window, operand 1']
    #allocation12 [shape = 's32[2]{0}', space=sflag, size = 0x8, scoped, tag = 'scoped memory for tpu_custom_call.1']
    %13 = vsyncpa [#allocation3], 0
    %s14 = scalar_lea.sflag [#allocation3], 1
    %15 = vsyncpa %s14, 0
    %16 = vsyncpa [#allocation6], 0
    %s17 = scalar_lea.sflag [#allocation6], 1
    %18 = vsyncpa %s17, 0
    %19 = vsyncpa [#allocation9], 0
    %20 = vsyncpa [#allocation4], 0
    %s21 = scalar_lea.sflag [#allocation4], 1
    %22 = vsyncpa %s21, 0
    %23 = vsyncpa [#allocation12], 0
    %s24 = scalar_lea.sflag [#allocation12], 1
    %25 = vsyncpa %s24, 0
    loop: start=0, step=1, limit=4
    $region2: #{tpu_custom_call.1} parent=1 // loop_pre_header
      _
    $region3: #{tpu_custom_call.1} parent=1 // loop_header
      %s27 = sphi 0, %s31
      %p28 = scmp.ge.s32.totalorder %s27, 4
      %s34 = sphi 0, %s46
      %s35 = sphi 0, %s42
      %s36 = sphi 0, %s34
      %s37 = sphi 0, %s35
      %s38 = sphi 0, %s36
      %s39 = sphi 0, %s37
      %s49 = sphi 0, %s51
      %s52 = sphi 0, %s49
      %s53 = sphi 0, %s52
      %s69 = sphi 0, %s53
      %s75 = sphi 0, %s77
      %s78 = sphi 0, %s75
      %s79 = sphi 0, %s78
      %s95 = sphi 0, %s79
      %s99 = sphi 0, %s99
      %s101 = sphi 0, %s99
      %s102 = sphi 0, %s101
      %s116 = sphi 0, %s102
      %s120 = sphi 0, %s120
      %s122 = sphi 0, %s120
      %s123 = sphi 0, %s122
      %s137 = sphi 0, %s123
      %s141 = sphi 0, %s141
      %s143 = sphi 0, %s141
      %s144 = sphi 0, %s143
      %s158 = sphi 0, %s144
      %s162 = sphi 0, %s162
      %s164 = sphi 0, %s162
      %s165 = sphi 0, %s164
      %s179 = sphi 0, %s165
      %s187 = sphi 0, %s189
      %s190 = sphi 0, %s187
      %s191 = sphi 0, %s190
      %s207 = sphi 0, %s191
      %s215 = sphi 0, %s217
      %s218 = sphi 0, %s215
      %s219 = sphi 0, %s218
      %s235 = sphi 0, %s219
    $region4: #{tpu_custom_call.1} parent=1 // loop_header_branch
      %30 = sbr.rel (%p28) target = $region8
    $region5: #{tpu_custom_call.1} parent=1 // loop_body
      %s32 = ssub.s32 %s27, 1
      %s33 = ssub.s32 %s27, 2
      %s40 = sadd.s32 1, %s35
      %p41 = scmp.ge.s32.totalorder %s40, 1
      %s42 = scalar_select %p41, 0, %s40
      %s43 = sadd.s32 1, %s34
      %s44 = scalar_select %p41, %s43, %s34
      %p45 = scmp.ge.s32.totalorder %s44, 2
      %s46 = scalar_select %p45, 0, %s44
      %s47 = ssub.s32 %s34, %s46
      %p48 = scmp.eq.s32.totalorder %s47, 0
      %s50 = sadd.s32 %s49, 1
      %s51 = scalar_select %p48, %s49, %s50
      %p54 = pneg %p48
      %p55 = scmp.eq.s32.totalorder %s27, 1
      %p56 = por %p54, %p55
      %p57 = scmp.ne.s32.totalorder %s49, %s52
      %p58 = scmp.eq.s32.totalorder %s27, 0
      %p59 = por %p57, %p58
      %p60 = scmp.ne.s32.totalorder %s49, %s52
      %p61 = scmp.eq.s32.totalorder %s32, 1
      %p62 = por %p60, %p61
      %p63 = scmp.ne.s32.totalorder %s52, %s53
      %p64 = scmp.eq.s32.totalorder %s32, 0
      %p65 = por %p63, %p64
      %p66 = scmp.ne.s32.totalorder %s52, %s53
      %p67 = scmp.eq.s32.totalorder %s33, 1
      %p68 = por %p66, %p67
      %p70 = scmp.ne.s32.totalorder %s53, %s69
      %p71 = scmp.eq.s32.totalorder %s33, 0
      %p72 = por %p70, %p71
      %s73 = ssub.s32 %s34, %s46
      %p74 = scmp.eq.s32.totalorder %s73, 0
      %s76 = sadd.s32 %s75, 1
      %s77 = scalar_select %p74, %s75, %s76
      %p80 = pneg %p74
      %p81 = scmp.eq.s32.totalorder %s27, 1
      %p82 = por %p80, %p81
      %p83 = scmp.ne.s32.totalorder %s75, %s78
      %p84 = scmp.eq.s32.totalorder %s27, 0
      %p85 = por %p83, %p84
      %p86 = scmp.ne.s32.totalorder %s75, %s78
      %p87 = scmp.eq.s32.totalorder %s32, 1
      %p88 = por %p86, %p87
      %p89 = scmp.ne.s32.totalorder %s78, %s79
      %p90 = scmp.eq.s32.totalorder %s32, 0
      %p91 = por %p89, %p90
      %p92 = scmp.ne.s32.totalorder %s78, %s79
      %p93 = scmp.eq.s32.totalorder %s33, 1
      %p94 = por %p92, %p93
      %p96 = scmp.ne.s32.totalorder %s79, %s95
      %p97 = scmp.eq.s32.totalorder %s33, 0
      %p98 = por %p96, %p97
      %s100 = sadd.s32 %s99, 1
      %p103 = scmp.eq.s32.totalorder %s27, 1
      %p104 = scmp.ne.s32.totalorder %s99, %s101
      %p105 = scmp.eq.s32.totalorder %s27, 0
      %p106 = por %p104, %p105
      %p107 = scmp.ne.s32.totalorder %s99, %s101
      %p108 = scmp.eq.s32.totalorder %s32, 1
      %p109 = por %p107, %p108
      %p110 = scmp.ne.s32.totalorder %s101, %s102
      %p111 = scmp.eq.s32.totalorder %s32, 0
      %p112 = por %p110, %p111
      %p113 = scmp.ne.s32.totalorder %s101, %s102
      %p114 = scmp.eq.s32.totalorder %s33, 1
      %p115 = por %p113, %p114
      %p117 = scmp.ne.s32.totalorder %s102, %s116
      %p118 = scmp.eq.s32.totalorder %s33, 0
      %p119 = por %p117, %p118
      %s121 = sadd.s32 %s120, 1
      %p124 = scmp.eq.s32.totalorder %s27, 1
      %p125 = scmp.ne.s32.totalorder %s120, %s122
      %p126 = scmp.eq.s32.totalorder %s27, 0
      %p127 = por %p125, %p126
      %p128 = scmp.ne.s32.totalorder %s120, %s122
      %p129 = scmp.eq.s32.totalorder %s32, 1
      %p130 = por %p128, %p129
      %p131 = scmp.ne.s32.totalorder %s122, %s123
      %p132 = scmp.eq.s32.totalorder %s32, 0
      %p133 = por %p131, %p132
      %p134 = scmp.ne.s32.totalorder %s122, %s123
      %p135 = scmp.eq.s32.totalorder %s33, 1
      %p136 = por %p134, %p135
      %p138 = scmp.ne.s32.totalorder %s123, %s137
      %p139 = scmp.eq.s32.totalorder %s33, 0
      %p140 = por %p138, %p139
      %s142 = sadd.s32 %s141, 1
      %p145 = scmp.eq.s32.totalorder %s27, 1
      %p146 = scmp.ne.s32.totalorder %s141, %s143
      %p147 = scmp.eq.s32.totalorder %s27, 0
      %p148 = por %p146, %p147
      %p149 = scmp.ne.s32.totalorder %s141, %s143
      %p150 = scmp.eq.s32.totalorder %s32, 1
      %p151 = por %p149, %p150
      %p152 = scmp.ne.s32.totalorder %s143, %s144
      %p153 = scmp.eq.s32.totalorder %s32, 0
      %p154 = por %p152, %p153
      %p155 = scmp.ne.s32.totalorder %s143, %s144
      %p156 = scmp.eq.s32.totalorder %s33, 1
      %p157 = por %p155, %p156
      %p159 = scmp.ne.s32.totalorder %s144, %s158
      %p160 = scmp.eq.s32.totalorder %s33, 0
      %p161 = por %p159, %p160
      %s163 = sadd.s32 %s162, 1
      %p166 = scmp.eq.s32.totalorder %s27, 1
      %p167 = scmp.ne.s32.totalorder %s162, %s164
      %p168 = scmp.eq.s32.totalorder %s27, 0
      %p169 = por %p167, %p168
      %p170 = scmp.ne.s32.totalorder %s162, %s164
      %p171 = scmp.eq.s32.totalorder %s32, 1
      %p172 = por %p170, %p171
      %p173 = scmp.ne.s32.totalorder %s164, %s165
      %p174 = scmp.eq.s32.totalorder %s32, 0
      %p175 = por %p173, %p174
      %p176 = scmp.ne.s32.totalorder %s164, %s165
      %p177 = scmp.eq.s32.totalorder %s33, 1
      %p178 = por %p176, %p177
      %p180 = scmp.ne.s32.totalorder %s165, %s179
      %p181 = scmp.eq.s32.totalorder %s33, 0
      %p182 = por %p180, %p181
      %s183 = ssub.s32 %s34, %s46
      %s184 = ssub.s32 %s35, %s42
      %s185 = sor.u32 %s183, %s184
      %p186 = scmp.eq.s32.totalorder %s185, 0
      %s188 = sadd.s32 %s187, 1
      %s189 = scalar_select %p186, %s187, %s188
      %p192 = pneg %p186
      %p193 = scmp.eq.s32.totalorder %s27, 1
      %p194 = por %p192, %p193
      %p195 = scmp.ne.s32.totalorder %s187, %s190
      %p196 = scmp.eq.s32.totalorder %s27, 0
      %p197 = por %p195, %p196
      %p198 = scmp.ne.s32.totalorder %s187, %s190
      %p199 = scmp.eq.s32.totalorder %s32, 1
      %p200 = por %p198, %p199
      %p201 = scmp.ne.s32.totalorder %s190, %s191
      %p202 = scmp.eq.s32.totalorder %s32, 0
      %p203 = por %p201, %p202
      %p204 = scmp.ne.s32.totalorder %s190, %s191
      %p205 = scmp.eq.s32.totalorder %s33, 1
      %p206 = por %p204, %p205
      %p208 = scmp.ne.s32.totalorder %s191, %s207
      %p209 = scmp.eq.s32.totalorder %s33, 0
      %p210 = por %p208, %p209
      %s211 = ssub.s32 %s34, %s46
      %s212 = ssub.s32 %s35, %s42
      %s213 = sor.u32 %s211, %s212
      %p214 = scmp.eq.s32.totalorder %s213, 0
      %s216 = sadd.s32 %s215, 1
      %s217 = scalar_select %p214, %s215, %s216
      %p220 = pneg %p214
      %p221 = scmp.eq.s32.totalorder %s27, 1
      %p222 = por %p220, %p221
      %p223 = scmp.ne.s32.totalorder %s215, %s218
      %p224 = scmp.eq.s32.totalorder %s27, 0
      %p225 = por %p223, %p224
      %p226 = scmp.ne.s32.totalorder %s215, %s218
      %p227 = scmp.eq.s32.totalorder %s32, 1
      %p228 = por %p226, %p227
      %p229 = scmp.ne.s32.totalorder %s218, %s219
      %p230 = scmp.eq.s32.totalorder %s32, 0
      %p231 = por %p229, %p230
      %p232 = scmp.ne.s32.totalorder %s218, %s219
      %p233 = scmp.eq.s32.totalorder %s33, 1
      %p234 = por %p232, %p233
      %p236 = scmp.ne.s32.totalorder %s219, %s235
      %p237 = scmp.eq.s32.totalorder %s33, 0
      %p238 = por %p236, %p237
      %p239 = scmp.le.s32.totalorder 1, %s27
      %p240 = scmp.lt.s32.totalorder %s27, 3
      %p241 = pnand %p239, %p240
      %p242 = pneg %p241
      // Predicated region
      $region9: #{tpu_custom_call.1} parent=5 // pred_check
        _
      $region10: #{tpu_custom_call.1} parent=5 // pred_check_branch
        %244 = sbr.rel (%p241) target = $region12
      $region11: #{tpu_custom_call.1} parent=5 // pred_region
        %s245 = ssub.s32 %s27, 1
        // Predicated region
        $region13: #{tpu_custom_call.1} parent=11 // pred_check
          %p246 = pneg %p112
        $region14: #{tpu_custom_call.1} parent=11 // pred_check_branch
          %248 = sbr.rel (%p246) target = $region16
        $region15: #{tpu_custom_call.1} parent=11 // pred_region
          %250 = vsyncadd [#allocation6], 0
          %s251 = sshll.u32 %s2, 4
          %s252 = int_to_ptr.hbm [resolvable:$true] %s251
          %s253 = sshll.u32 [#allocation7], 4
          %s254 = int_to_ptr.vmem [resolvable:$true] %s253
          %259 = dma.hbm_to_vmem [thread:$0]  %s252, 256, %s254, [#allocation6], 64, 64, 4
        $region16: #{tpu_custom_call.1} parent=11 // pred_fallthru
          _
        // Predicated region
        $region17: #{tpu_custom_call.1} parent=11 // pred_check
          %p260 = pneg %p133
        $region18: #{tpu_custom_call.1} parent=11 // pred_check_branch
          %262 = sbr.rel (%p260) target = $region20
        $region19: #{tpu_custom_call.1} parent=11 // pred_region
          _
        $region20: #{tpu_custom_call.1} parent=11 // pred_fallthru
          _
        // Predicated region
        $region21: #{tpu_custom_call.1} parent=11 // pred_check
          %p263 = pneg %p154
        $region22: #{tpu_custom_call.1} parent=11 // pred_check_branch
          %265 = sbr.rel (%p263) target = $region24
        $region23: #{tpu_custom_call.1} parent=11 // pred_region
          %267 = vsyncadd [#allocation9], 0
          %s268 = sshll.u32 %s4, 4
          %s269 = int_to_ptr.hbm [resolvable:$true] %s268
          %s270 = sshll.u32 [#allocation8], 4
          %s271 = int_to_ptr.vmem [resolvable:$true] %s270
          %276 = dma.hbm_to_vmem [thread:$0]  %s269, 256, %s271, [#allocation9], 64, 64, 4
        $region24: #{tpu_custom_call.1} parent=11 // pred_fallthru
          _
        // Predicated region
        $region25: #{tpu_custom_call.1} parent=11 // pred_check
          %p277 = pneg %p175
        $region26: #{tpu_custom_call.1} parent=11 // pred_check_branch
          %279 = sbr.rel (%p277) target = $region28
        $region27: #{tpu_custom_call.1} parent=11 // pred_region
          _
        $region28: #{tpu_custom_call.1} parent=11 // pred_fallthru
          _
      $region12: #{tpu_custom_call.1} parent=5 // pred_fallthru
        _
      %p280 = scmp.lt.s32.totalorder %s27, 2
      // Predicated region
      $region29: #{tpu_custom_call.1} parent=5 // pred_check
        %p281 = pneg %p280
      $region30: #{tpu_custom_call.1} parent=5 // pred_check_branch
        %283 = sbr.rel (%p281) target = $region32
      $region31: #{tpu_custom_call.1} parent=5 // pred_region
        // Predicated region
        $region33: #{tpu_custom_call.1} parent=31 // pred_check
          %p284 = pneg %p59
        $region34: #{tpu_custom_call.1} parent=31 // pred_check_branch
          %286 = sbr.rel (%p284) target = $region36
        $region35: #{tpu_custom_call.1} parent=31 // pred_region
          %s287 = sand.u32 %s49, 1
          %s288 = scalar_lea.sflag [#allocation3], %s287
          %s289 = sand.u32 %s49, 1
          %s290 = smul.addr %s289, 4
          %s291 = scalar_lea.vmem [#allocation2], %s290
          %293 = vsyncadd %s288, 0
          %s294 = smul.addr %s34, 4
          %s295 = scalar_lea.hbm %s0, %s294
          %s297 = sshll.u32 %s295, 4
          %s298 = int_to_ptr.hbm [resolvable:$true] %s297
          %s299 = sshll.u32 %s291, 4
          %s300 = int_to_ptr.vmem [resolvable:$true] %s299
          %302 = dma.hbm_to_vmem [thread:$0]  %s298, 64, %s300, %s288
        $region36: #{tpu_custom_call.1} parent=31 // pred_fallthru
          _
        // Predicated region
        $region37: #{tpu_custom_call.1} parent=31 // pred_check
          %p303 = pneg %p85
        $region38: #{tpu_custom_call.1} parent=31 // pred_check_branch
          %305 = sbr.rel (%p303) target = $region40
        $region39: #{tpu_custom_call.1} parent=31 // pred_region
          %s306 = sand.u32 %s27, 1
          %s307 = scalar_lea.sflag [#allocation6], %s306
          %s308 = sand.u32 %s75, 1
          %s309 = smul.addr %s308, 4
          %s310 = scalar_lea.vmem [#allocation5], %s309
          %312 = vsyncadd %s307, 0
          %s313 = smul.addr %s34, 4
          %s314 = scalar_lea.hbm %s1, %s313
          %s316 = sshll.u32 %s314, 4
          %s317 = int_to_ptr.hbm [resolvable:$true] %s316
          %s318 = sshll.u32 %s310, 4
          %s319 = int_to_ptr.vmem [resolvable:$true] %s318
          %321 = dma.hbm_to_vmem [thread:$0]  %s317, 64, %s319, %s307
        $region40: #{tpu_custom_call.1} parent=31 // pred_fallthru
          _
      $region32: #{tpu_custom_call.1} parent=5 // pred_fallthru
        _
      %p322 = scmp.le.s32.totalorder 1, %s27
      %p323 = scmp.lt.s32.totalorder %s27, 3
      %p324 = pnand %p322, %p323
      %p325 = pneg %p324
      // Predicated region
      $region41: #{tpu_custom_call.1} parent=5 // pred_check
        _
      $region42: #{tpu_custom_call.1} parent=5 // pred_check_branch
        %327 = sbr.rel (%p324) target = $region44
      $region43: #{tpu_custom_call.1} parent=5 // pred_region
        %s328 = ssub.s32 %s27, 1
        %s329 = sand.u32 %s52, 1
        %s330 = scalar_lea.sflag [#allocation3], %s329
        %s331 = sand.u32 %s52, 1
        %s332 = smul.addr %s331, 4
        %s333 = scalar_lea.vmem [#allocation2], %s332
        // Predicated region
        $region45: #{tpu_custom_call.1} parent=43 // pred_check
          %p334 = pneg %p65
        $region46: #{tpu_custom_call.1} parent=43 // pred_check_branch
          %336 = sbr.rel (%p334) target = $region48
        $region47: #{tpu_custom_call.1} parent=43 // pred_region
          %338 = dma.done %s330, 64
        $region48: #{tpu_custom_call.1} parent=43 // pred_fallthru
          _
        %s339 = sand.u32 %s32, 1
        %s340 = scalar_lea.sflag [#allocation6], %s339
        %s341 = sand.u32 %s78, 1
        %s342 = smul.addr %s341, 4
        %s343 = scalar_lea.vmem [#allocation5], %s342
        // Predicated region
        $region49: #{tpu_custom_call.1} parent=43 // pred_check
          %p344 = pneg %p91
        $region50: #{tpu_custom_call.1} parent=43 // pred_check_branch
          %346 = sbr.rel (%p344) target = $region52
        $region51: #{tpu_custom_call.1} parent=43 // pred_region
          %348 = dma.done %s340, 64
        $region52: #{tpu_custom_call.1} parent=43 // pred_fallthru
          _
        // Predicated region
        $region53: #{tpu_custom_call.1} parent=43 // pred_check
          %p349 = pneg %p112
        $region54: #{tpu_custom_call.1} parent=43 // pred_check_branch
          %351 = sbr.rel (%p349) target = $region56
        $region55: #{tpu_custom_call.1} parent=43 // pred_region
          %353 = dma.done [#allocation6], 256
        $region56: #{tpu_custom_call.1} parent=43 // pred_fallthru
          _
        // Predicated region
        $region57: #{tpu_custom_call.1} parent=43 // pred_check
          %p354 = pneg %p154
        $region58: #{tpu_custom_call.1} parent=43 // pred_check_branch
          %356 = sbr.rel (%p354) target = $region60
        $region59: #{tpu_custom_call.1} parent=43 // pred_region
          %358 = dma.done [#allocation9], 256
        $region60: #{tpu_custom_call.1} parent=43 // pred_fallthru
          _
        %s359 = sand.u32 %s52, 1
        %s360 = scalar_lea.sflag [#allocation3], %s359
        %s361 = sand.u32 %s52, 1
        %s362 = smul.addr %s361, 4
        %s363 = scalar_lea.vmem [#allocation2], %s362
        %p364 = pneg %p65
        %p365 = pneg %p62
        %s366 = sand.u32 %s32, 1
        %s367 = scalar_lea.sflag [#allocation6], %s366
        %s368 = sand.u32 %s78, 1
        %s369 = smul.addr %s368, 4
        %s370 = scalar_lea.vmem [#allocation5], %s369
        %p371 = pneg %p91
        %p372 = pneg %p88
        %p373 = pneg %p112
        %p374 = pneg %p109
        %p375 = pneg %p133
        %p376 = pneg %p130
        %p377 = pneg %p154
        %p378 = pneg %p151
        %p379 = pneg %p175
        %p380 = pneg %p172
        %p381 = pneg %p203
        %p382 = pneg %p200
        %s383 = sand.u32 %s190, 1
        %s384 = scalar_lea.sflag [#allocation4], %s383
        %s385 = sand.u32 %s190, 1
        %s386 = smul.addr %s385, 4
        %s387 = scalar_lea.vmem [#allocation10], %s386
        %p388 = pneg %p231
        %p389 = pneg %p228
        %s390 = sand.u32 %s218, 1
        %s391 = scalar_lea.sflag [#allocation12], %s390
        %s392 = sand.u32 %s218, 1
        %s393 = smul.addr %s392, 4
        %s394 = scalar_lea.vmem [#allocation11], %s393
        %v396 = vld [vmem:[%s333] sm:$0xf]
        %s397 = smul.u32 %s37, 4
        %s398 = smul.addr %s397, 4
        %s399 = scalar_lea.vmem [#allocation7], %s398
        %v400 = vld [vmem:[%s399] sm:$0xf]
        %v401 = vld [vmem:[%s399 + $0x4] sm:$0xf]
        %v402 = vld [vmem:[%s399 + $0x8] sm:$0xf]
        %v403 = vld [vmem:[%s399 + $0xc] sm:$0xf]
        %s404 = scalar_lea.vmem %s3, %s37
        %v405 = vld [vmem:[%s404] sm:$0x1]
        %v407 = vperm.slane %v405, 0
        %v413 = vunpack.c.l.b16 %v400
        %v414 = vunpack.c.l.b16 %v401
        %v415 = vunpack.c.l.b16 %v402
        %v416 = vunpack.c.l.b16 %v403
        %v417 = vpack.c.b16 %v414, %v413
        %v418 = vpack.c.b16 %v416, %v415
        %vm421 = vcmask 261120
        %v423 = vsel %vm421, %v396, 0
        %425 = vmatpush.bf16.msra.mxu0 0
        %426 = vmatpush.bf16.msra.mxu0 0
        %427 = vmatpush.bf16.msra.mxu0 0
        %428 = vmatpush.bf16.msra.mxu0 0
        %429 = vmatpush.bf16.msra.mxu0 0
        %430 = vmatpush.bf16.msra.mxu0 0
        %431 = vmatpush.bf16.msra.mxu0 %v418
        %432 = vmatpush.bf16.msra.mxu0 %v417
        %433 = vmatmul.bf16.gmra.mxu0 %v423
        %v434 = vpop.f32.mrf.mxu0
        %v435 = vadd.f32 %v407, %v434
        %v436 = vpop.f32.mrf.mxu0
        %437 = vdwg.mxu0
        %v438 = vpack.c.bf16 %v435, %v435
        %vm439 = vcmask 257024
        %440 = vst.msk [vmem:[%s387] sm:$0xf] %vm439, %v438
        %v441 = vld [vmem:[%s343] sm:$0xf]
        %s442 = smul.addr %s397, 4
        %s443 = scalar_lea.vmem [#allocation8], %s442
        %v444 = vld [vmem:[%s443] sm:$0xf]
        %v445 = vld [vmem:[%s443 + $0x4] sm:$0xf]
        %v446 = vld [vmem:[%s443 + $0x8] sm:$0xf]
        %v447 = vld [vmem:[%s443 + $0xc] sm:$0xf]
        %s448 = scalar_lea.vmem %s5, %s37
        %v449 = vld [vmem:[%s448] sm:$0x1]
        %v451 = vperm.slane %v449, 0
        %v457 = vunpack.c.l.b16 %v444
        %v458 = vunpack.c.l.b16 %v445
        %v459 = vunpack.c.l.b16 %v446
        %v460 = vunpack.c.l.b16 %v447
        %v461 = vpack.c.b16 %v458, %v457
        %v462 = vpack.c.b16 %v460, %v459
        %v466 = vsel %vm421, %v441, 0
        %468 = vmatpush.bf16.msra.mxu0 0
        %469 = vmatpush.bf16.msra.mxu0 0
        %470 = vmatpush.bf16.msra.mxu0 0
        %471 = vmatpush.bf16.msra.mxu0 0
        %472 = vmatpush.bf16.msra.mxu0 0
        %473 = vmatpush.bf16.msra.mxu0 0
        %474 = vmatpush.bf16.msra.mxu0 %v462
        %475 = vmatpush.bf16.msra.mxu0 %v461
        %476 = vmatmul.bf16.gmra.mxu0 %v466
        %v477 = vpop.f32.mrf.mxu0
        %v478 = vadd.f32 %v451, %v477
        %v479 = vpop.f32.mrf.mxu0
        %480 = vdwg.mxu0
        %v481 = vpack.c.bf16 %v478, %v478
        %482 = vst.msk [vmem:[%s394] sm:$0xf] %vm439, %v481
        %s483 = sand.u32 %s190, 1
        %s484 = scalar_lea.sflag [#allocation4], %s483
        %s485 = sand.u32 %s190, 1
        %s486 = smul.addr %s485, 4
        %s487 = scalar_lea.vmem [#allocation10], %s486
        %s488 = sand.u32 %s218, 1
        %s489 = scalar_lea.sflag [#allocation12], %s488
        %s490 = sand.u32 %s218, 1
        %s491 = smul.addr %s490, 4
        %s492 = scalar_lea.vmem [#allocation11], %s491
        // Predicated region
        $region61: #{tpu_custom_call.1} parent=43 // pred_check
          %p493 = pneg %p200
        $region62: #{tpu_custom_call.1} parent=43 // pred_check_branch
          %495 = sbr.rel (%p493) target = $region64
        $region63: #{tpu_custom_call.1} parent=43 // pred_region
          %497 = vsyncadd %s484, 0
          %s498 = sadd.s32 %s37, %s36
          %s499 = smul.addr %s498, 4
          %s500 = scalar_lea.hbm %s6, %s499
          %s502 = sshll.u32 %s487, 4
          %s503 = int_to_ptr.vmem [resolvable:$true] %s502
          %s504 = sshll.u32 %s500, 4
          %s505 = int_to_ptr.hbm [resolvable:$true] %s504
          %507 = dma.vmem_to_hbm [thread:$0]  %s503, 64, %s505, %s484
        $region64: #{tpu_custom_call.1} parent=43 // pred_fallthru
          _
        // Predicated region
        $region65: #{tpu_custom_call.1} parent=43 // pred_check
          %p508 = pneg %p228
        $region66: #{tpu_custom_call.1} parent=43 // pred_check_branch
          %510 = sbr.rel (%p508) target = $region68
        $region67: #{tpu_custom_call.1} parent=43 // pred_region
          %512 = vsyncadd %s489, 0
          %s513 = sadd.s32 %s37, %s36
          %s514 = smul.addr %s513, 4
          %s515 = scalar_lea.hbm %s7, %s514
          %s517 = sshll.u32 %s492, 4
          %s518 = int_to_ptr.vmem [resolvable:$true] %s517
          %s519 = sshll.u32 %s515, 4
          %s520 = int_to_ptr.hbm [resolvable:$true] %s519
          %522 = dma.vmem_to_hbm [thread:$0]  %s518, 64, %s520, %s489
        $region68: #{tpu_custom_call.1} parent=43 // pred_fallthru
          _
      $region44: #{tpu_custom_call.1} parent=5 // pred_fallthru
        _
      %p523 = scmp.le.s32.totalorder 2, %s27
      // Predicated region
      $region69: #{tpu_custom_call.1} parent=5 // pred_check
        %p524 = pneg %p523
      $region70: #{tpu_custom_call.1} parent=5 // pred_check_branch
        %526 = sbr.rel (%p524) target = $region72
      $region71: #{tpu_custom_call.1} parent=5 // pred_region
        %s527 = ssub.s32 %s27, 2
        // Predicated region
        $region73: #{tpu_custom_call.1} parent=71 // pred_check
          %p528 = pneg %p206
        $region74: #{tpu_custom_call.1} parent=71 // pred_check_branch
          %530 = sbr.rel (%p528) target = $region76
        $region75: #{tpu_custom_call.1} parent=71 // pred_region
          %s531 = sand.u32 %s191, 1
          %s532 = scalar_lea.sflag [#allocation4], %s531
          %s533 = sand.u32 %s191, 1
          %s534 = smul.addr %s533, 4
          %s535 = scalar_lea.vmem [#allocation10], %s534
          %537 = dma.done %s532, 64
        $region76: #{tpu_custom_call.1} parent=71 // pred_fallthru
          _
        // Predicated region
        $region77: #{tpu_custom_call.1} parent=71 // pred_check
          %p538 = pneg %p234
        $region78: #{tpu_custom_call.1} parent=71 // pred_check_branch
          %540 = sbr.rel (%p538) target = $region80
        $region79: #{tpu_custom_call.1} parent=71 // pred_region
          %s541 = sand.u32 %s219, 1
          %s542 = scalar_lea.sflag [#allocation12], %s541
          %s543 = sand.u32 %s219, 1
          %s544 = smul.addr %s543, 4
          %s545 = scalar_lea.vmem [#allocation11], %s544
          %547 = dma.done %s542, 64
        $region80: #{tpu_custom_call.1} parent=71 // pred_fallthru
          _
      $region72: #{tpu_custom_call.1} parent=5 // pred_fallthru
        _
    $region6: #{tpu_custom_call.1} parent=1 // loop_footer
      %s31 = sadd.s32 1, %s27
    $region7: #{tpu_custom_call.1} parent=1 // loop_footer_branch
      %26 = sbr.rel target = $region3
    $region8: #{tpu_custom_call.1} parent=1 // loop_exit
      _
    %548 = vsyncpa [#allocation3], 1
    %s549 = scalar_lea.sflag [#allocation3], 1
    %550 = vsyncpa %s549, 1
    %551 = vsyncpa [#allocation6], 1
    %s552 = scalar_lea.sflag [#allocation6], 1
    %553 = vsyncpa %s552, 1
    %554 = vsyncpa [#allocation9], 1
    %555 = vsyncpa [#allocation4], 1
    %s556 = scalar_lea.sflag [#allocation4], 1
    %557 = vsyncpa %s556, 1
    %558 = vsyncpa [#allocation12], 1
    %s559 = scalar_lea.sflag [#allocation12], 1
    %560 = vsyncpa %s559, 1

</llo_original>
